<compile_context>
chip_gen: v5e
topology: v5e:2x2
jax: 0.10.0
libtpu: 0.0.40
codegen_flags: <defaults>
</compile_context>

<pallas_src>
import functools
import math

import jax
import jax.numpy as jnp
from jax import lax
from jax.experimental import pallas as pl
from jax.experimental.pallas import tpu as pltpu


_LANES = 512           # lane-dense layout: large multiple of 128
_MAX_TILE_ROWS = 256   # 256 x 512 x 4B = 512 KiB per f32 block


def _round_up(n, m):
    return ((n + m - 1) // m) * m


def _fmix32(x):
    """32-bit finalizer hash (lowbias32): strong avalanche, plain VPU int ops."""
    x = x ^ (x >> 16)
    x = x * jnp.uint32(0x7FEB352D)
    x = x ^ (x >> 15)
    x = x * jnp.uint32(0x846CA68B)
    x = x ^ (x >> 16)
    return x


def _add_noise_kernel(seed_ref, x_ref, o_ref, *, sigma, lanes, tile_rows):
    """out = x + sigma * N(0,1), noise from a counter-based hash + Box-Muller."""
    half = tile_rows // 2
    seed = seed_ref[0].astype(jnp.uint32)

    # Unique global counter for each element of the FIRST half of this tile.
    # The second half of the tile consumes the sin-branch of the same pairs.
    row0 = (pl.program_id(0) * tile_rows).astype(jnp.uint32)
    r_iota = lax.broadcasted_iota(jnp.uint32, (half, lanes), 0)
    l_iota = lax.broadcasted_iota(jnp.uint32, (half, lanes), 1)
    idx = (row0 + r_iota) * jnp.uint32(lanes) + l_iota

    # Two decorrelated 32-bit streams keyed by (seed, idx).
    k1 = seed * jnp.uint32(0x9E3779B1) + jnp.uint32(0x7F4A7C15)
    k2 = seed * jnp.uint32(0x85EBCA77) + jnp.uint32(0x165667B1)
    bits1 = _fmix32(idx ^ k1)
    bits2 = _fmix32((idx + jnp.uint32(0x68E31DA4)) ^ k2)

    # Mantissa trick: (bits >> 9) | 0x3F800000 bit-casts to a float in [1, 2).
    one = jnp.uint32(0x3F800000)
    f1 = lax.bitcast_convert_type((bits1 >> 9) | one, jnp.float32)   # [1, 2)
    f2 = lax.bitcast_convert_type((bits2 >> 9) | one, jnp.float32)   # [1, 2)
    u1 = jnp.float32(2.0) - f1                                       # (0, 1], log-safe
    theta = jnp.float32(2.0 * math.pi) * (f2 - jnp.float32(1.0))     # [0, 2*pi)

    # Box-Muller, both outputs: z0 fills the first half of the tile rows,
    # z1 the second half (independent standard normals).
    r = jnp.sqrt(jnp.float32(-2.0) * jnp.log(u1))
    z = jnp.concatenate([r * jnp.cos(theta), r * jnp.sin(theta)], axis=0)

    x = x_ref[...].astype(jnp.float32)
    o_ref[...] = (x + jnp.float32(sigma) * z).astype(o_ref.dtype)


def add_gaussian_noise(x, *, sigma=0.1, seed=0, training=True):
    """JAX/Pallas equivalent of AddGaussianNoise.forward."""
    if (not training) or sigma == 0.0:
        # Matches the PyTorch `else: return x` branch exactly.
        return x

    orig_shape = x.shape
    n = x.size

    # Lane-dense repack: flatten and pad to a (rows_p, 512) slab.
    rows = -(-n // _LANES)                          # cdiv
    tile_rows = min(_MAX_TILE_ROWS, _round_up(max(rows, 1), 16))
    rows_p = _round_up(rows, tile_rows)
    n_pad = rows_p * _LANES

    xf = jnp.ravel(x)
    if n_pad != n:
        xf = jnp.pad(xf, (0, n_pad - n))
    x2 = xf.reshape(rows_p, _LANES)
    seed_arr = jnp.asarray([seed], dtype=jnp.int32)

    grid = (rows_p // tile_rows,)
    itemsize = jnp.dtype(x.dtype).itemsize

    out2 = pl.pallas_call(
        functools.partial(_add_noise_kernel, sigma=float(sigma),
                          lanes=_LANES, tile_rows=tile_rows),
        out_shape=jax.ShapeDtypeStruct((rows_p, _LANES), x.dtype),
        grid=grid,
        in_specs=[
            pl.BlockSpec(memory_space=pltpu.MemorySpace.SMEM),      # seed scalar
            pl.BlockSpec((tile_rows, _LANES), lambda i: (i, 0)),    # x tile
        ],
        out_specs=pl.BlockSpec((tile_rows, _LANES), lambda i: (i, 0)),
        compiler_params=pltpu.CompilerParams(
            dimension_semantics=("parallel",)),
        cost_estimate=pl.CostEstimate(
            flops=30 * n_pad,
            transcendentals=2 * n_pad,
            bytes_accessed=2 * n_pad * itemsize),
    )(seed_arr, x2)

    return out2.reshape(-1)[:n].reshape(orig_shape)


if __name__ == "__main__":
    key = jax.random.PRNGKey(0)
    # Small NCHW-style input, consistent with the module's usage inside an MLP/conv stack.
    x = jax.random.normal(key, (2, 4, 16, 16), dtype=jnp.float32)

    sigma = 0.1

    # Training mode: noise added in the Pallas kernel.
    y_train = jax.block_until_ready(
        add_gaussian_noise(x, sigma=sigma, seed=42, training=True))

    # Eval mode (or sigma == 0): exact identity, like the PyTorch module.
    y_eval = jax.block_until_ready(
        add_gaussian_noise(x, sigma=sigma, seed=42, training=False))

    assert y_train.shape == x.shape and y_train.dtype == x.dtype
    assert bool(jnp.all(jnp.isfinite(y_train)))
    # Identity branch must be bit-exact.
    assert bool(jnp.array_equal(y_eval, x))
    # Noise magnitude sanity check: residual std should be ~sigma.
    resid_std = float(jnp.std(y_train - x))
    assert 0.25 * sigma < resid_std < 4.0 * sigma, resid_std

    print("KERNEL_OK")
</pallas_src>

<mosaic_0001>
module attributes {stable_mosaic.version = 11 : i64} {
  func.func @_add_noise_kernel(%arg0: i32, %arg1: memref<1xi32, #tpu.memory_space<smem>>, %arg2: memref<16x512xf32, #tpu.memory_space<vmem>>, %arg3: memref<16x512xf32, #tpu.memory_space<vmem>>) attributes {dimension_semantics = [#tpu.dimension_semantics<parallel>], iteration_bounds = array<i64: 1>, scalar_prefetch = 0 : i64, scratch_operands = 0 : i64, tpu.core_type = #tpu.core_type<tc>, window_params = [{transform_indices = @transform_0, window_bounds = array<i64: 1>}, {transform_indices = @transform_1, window_bounds = array<i64: 16, 512>}, {transform_indices = @transform_2, window_bounds = array<i64: 16, 512>}]} {
    %c0 = arith.constant 0 : index
    %0 = memref.load %arg1[%c0] : memref<1xi32, #tpu.memory_space<smem>>
    %c16_i32 = arith.constant 16 : i32
    %1 = arith.muli %arg0, %c16_i32 : i32
    %2 = tpu.iota {dimensions = array<i32: 0>} : vector<8x512xi32>
    %3 = tpu.iota {dimensions = array<i32: 1>} : vector<8x512xi32>
    %4 = vector.broadcast %1 : i32 to vector<8x512xi32>
    %5 = arith.addi %4, %2 : vector<8x512xi32>
    %c512_i32 = arith.constant 512 : i32
    %6 = vector.broadcast %c512_i32 : i32 to vector<8x512xi32>
    %7 = arith.muli %5, %6 : vector<8x512xi32>
    %8 = arith.addi %7, %3 : vector<8x512xi32>
    %c-1640531535_i32 = arith.constant -1640531535 : i32
    %9 = arith.muli %0, %c-1640531535_i32 : i32
    %c2135587861_i32 = arith.constant 2135587861 : i32
    %10 = arith.addi %9, %c2135587861_i32 : i32
    %c-2048144777_i32 = arith.constant -2048144777 : i32
    %11 = arith.muli %0, %c-2048144777_i32 : i32
    %c374761393_i32 = arith.constant 374761393 : i32
    %12 = arith.addi %11, %c374761393_i32 : i32
    %13 = vector.broadcast %10 : i32 to vector<8x512xi32>
    %14 = arith.xori %8, %13 : vector<8x512xi32>
    %c16_i32_0 = arith.constant 16 : i32
    %15 = vector.broadcast %c16_i32_0 : i32 to vector<8x512xi32>
    %16 = arith.shrui %14, %15 : vector<8x512xi32>
    %17 = arith.xori %14, %16 : vector<8x512xi32>
    %c2146121005_i32 = arith.constant 2146121005 : i32
    %18 = vector.broadcast %c2146121005_i32 : i32 to vector<8x512xi32>
    %19 = arith.muli %17, %18 : vector<8x512xi32>
    %c15_i32 = arith.constant 15 : i32
    %20 = vector.broadcast %c15_i32 : i32 to vector<8x512xi32>
    %21 = arith.shrui %19, %20 : vector<8x512xi32>
    %22 = arith.xori %19, %21 : vector<8x512xi32>
    %c-2073254261_i32 = arith.constant -2073254261 : i32
    %23 = vector.broadcast %c-2073254261_i32 : i32 to vector<8x512xi32>
    %24 = arith.muli %22, %23 : vector<8x512xi32>
    %c16_i32_1 = arith.constant 16 : i32
    %25 = vector.broadcast %c16_i32_1 : i32 to vector<8x512xi32>
    %26 = arith.shrui %24, %25 : vector<8x512xi32>
    %27 = arith.xori %24, %26 : vector<8x512xi32>
    %c1759714724_i32 = arith.constant 1759714724 : i32
    %28 = vector.broadcast %c1759714724_i32 : i32 to vector<8x512xi32>
    %29 = arith.addi %8, %28 : vector<8x512xi32>
    %30 = vector.broadcast %12 : i32 to vector<8x512xi32>
    %31 = arith.xori %29, %30 : vector<8x512xi32>
    %c16_i32_2 = arith.constant 16 : i32
    %32 = vector.broadcast %c16_i32_2 : i32 to vector<8x512xi32>
    %33 = arith.shrui %31, %32 : vector<8x512xi32>
    %34 = arith.xori %31, %33 : vector<8x512xi32>
    %c2146121005_i32_3 = arith.constant 2146121005 : i32
    %35 = vector.broadcast %c2146121005_i32_3 : i32 to vector<8x512xi32>
    %36 = arith.muli %34, %35 : vector<8x512xi32>
    %c15_i32_4 = arith.constant 15 : i32
    %37 = vector.broadcast %c15_i32_4 : i32 to vector<8x512xi32>
    %38 = arith.shrui %36, %37 : vector<8x512xi32>
    %39 = arith.xori %36, %38 : vector<8x512xi32>
    %c-2073254261_i32_5 = arith.constant -2073254261 : i32
    %40 = vector.broadcast %c-2073254261_i32_5 : i32 to vector<8x512xi32>
    %41 = arith.muli %39, %40 : vector<8x512xi32>
    %c16_i32_6 = arith.constant 16 : i32
    %42 = vector.broadcast %c16_i32_6 : i32 to vector<8x512xi32>
    %43 = arith.shrui %41, %42 : vector<8x512xi32>
    %44 = arith.xori %41, %43 : vector<8x512xi32>
    %c9_i32 = arith.constant 9 : i32
    %45 = vector.broadcast %c9_i32 : i32 to vector<8x512xi32>
    %46 = arith.shrui %27, %45 : vector<8x512xi32>
    %c1065353216_i32 = arith.constant 1065353216 : i32
    %47 = vector.broadcast %c1065353216_i32 : i32 to vector<8x512xi32>
    %48 = arith.ori %46, %47 : vector<8x512xi32>
    %49 = tpu.bitcast %48 : vector<8x512xi32> -> vector<8x512xf32>
    %c9_i32_7 = arith.constant 9 : i32
    %50 = vector.broadcast %c9_i32_7 : i32 to vector<8x512xi32>
    %51 = arith.shrui %44, %50 : vector<8x512xi32>
    %c1065353216_i32_8 = arith.constant 1065353216 : i32
    %52 = vector.broadcast %c1065353216_i32_8 : i32 to vector<8x512xi32>
    %53 = arith.ori %51, %52 : vector<8x512xi32>
    %54 = tpu.bitcast %53 : vector<8x512xi32> -> vector<8x512xf32>
    %cst = arith.constant 2.000000e+00 : f32
    %55 = vector.broadcast %cst : f32 to vector<8x512xf32>
    %56 = arith.subf %55, %49 : vector<8x512xf32>
    %cst_9 = arith.constant 1.000000e+00 : f32
    %57 = vector.broadcast %cst_9 : f32 to vector<8x512xf32>
    %58 = arith.subf %54, %57 : vector<8x512xf32>
    %cst_10 = arith.constant 6.28318548 : f32
    %59 = vector.broadcast %cst_10 : f32 to vector<8x512xf32>
    %60 = arith.mulf %59, %58 : vector<8x512xf32>
    %61 = math.log %56 : vector<8x512xf32>
    %cst_11 = arith.constant -2.000000e+00 : f32
    %62 = vector.broadcast %cst_11 : f32 to vector<8x512xf32>
    %63 = arith.mulf %62, %61 : vector<8x512xf32>
    %64 = math.sqrt %63 : vector<8x512xf32>
    %65 = math.cos %60 : vector<8x512xf32>
    %66 = arith.mulf %64, %65 : vector<8x512xf32>
    %67 = math.sin %60 : vector<8x512xf32>
    %68 = arith.mulf %64, %67 : vector<8x512xf32>
    %69 = tpu.concatenate %66, %68 in 0 : vector<8x512xf32>, vector<8x512xf32> -> vector<16x512xf32>
    %c0_12 = arith.constant 0 : index
    %c0_13 = arith.constant 0 : index
    %70 = vector.load %arg2[%c0_12, %c0_13] : memref<16x512xf32, #tpu.memory_space<vmem>>, vector<16x512xf32>
    %cst_14 = arith.constant 1.000000e-01 : f32
    %71 = vector.broadcast %cst_14 : f32 to vector<16x512xf32>
    %72 = arith.mulf %71, %69 : vector<16x512xf32>
    %73 = arith.addf %70, %72 : vector<16x512xf32>
    %c0_15 = arith.constant 0 : index
    %c0_16 = arith.constant 0 : index
    %74 = vector.load %arg3[%c0_15, %c0_16] : memref<16x512xf32, #tpu.memory_space<vmem>>, vector<16x512xf32>
    tpu.vector_store %arg3[%c0_15, %c0_16], %73 {strides = array<i32>} : memref<16x512xf32, #tpu.memory_space<vmem>>, vector<16x512xf32>,
    return
  }
  func.func @transform_0(%arg0: i32) -> i32 {
    %c0_i32 = arith.constant 0 : i32
    %c0_i32_0 = arith.constant 0 : i32
    return %c0_i32 : i32
  }
  func.func @transform_1(%arg0: i32) -> (i32, i32) {
    %c0_i32 = arith.constant 0 : i32
    %c0_i32_0 = arith.constant 0 : i32
    return %arg0, %c0_i32 : i32, i32
  }
  func.func @transform_2(%arg0: i32) -> (i32, i32) {
    %c0_i32 = arith.constant 0 : i32
    %c0_i32_0 = arith.constant 0 : i32
    return %arg0, %c0_i32 : i32, i32
  }
}

</mosaic_0001>

<llo_original>
// kernel: tpu_custom_call.1
$region0: #{tpu_custom_call.1}
  #allocation0 [shape = 'u32[]', space=smem, size = 0x4, offset = 0x4, fixed_abs, tag = 'smem constant byte address 0x4 - core index']
  #allocation1 [shape = 'u32[72,128]{1,0:T(1,128)}', space=vmem, size = 0x9000, scoped, tag = 'internal scratch']
  #allocation2 [shape = 's32[1]{0:T(128)S(6)}', space=smem, size = 0x200, scoped, tag = 'scoped memory for tpu_custom_call.1']
  %s0 = inlined_call_operand.<no memory space> [shape: s32[1], index: 0, kind: input, shape index: {}]
  %s1 = inlined_call_operand.hbm [shape: f32[16,512], index: 1, kind: input, shape index: {}]
  %s2 = inlined_call_operand.hbm [shape: f32[16,512], index: 2, kind: output, shape index: {}]
  %s3 = sld [smem:[#allocation0]]
  $region22: #{tpu_custom_call.1} parent=0
    _
  %s5 = ssub.s32 1, %s3
  %s6 = scalar_select 0, %s5, %s3
  %7 = sst [smem:[#allocation2]] %s0
  $region1: #{tpu_custom_call.1} parent=0
    #allocation3 [shape = 'u8[32768]{0}', space=vmem, size = 0x8000, scoped, tag = 'input window, operand 1, single buffered']
    #allocation4 [shape = 's32[1]{0}', space=sflag, size = 0x4, scoped, tag = 'scoped memory for tpu_custom_call.1']
    #allocation5 [shape = 's32[1]{0}', space=sflag, size = 0x4, scoped, tag = 'scoped memory for tpu_custom_call.1']
    #allocation6 [shape = 'u8[32768]{0}', space=vmem, size = 0x8000, scoped, tag = 'output window, operand 0, single buffered']
    %8 = vsyncpa [#allocation4], 0
    %9 = vsyncpa [#allocation5], 0
    // Predicated region
    $region2: #{tpu_custom_call.1} parent=1 // pred_check
      _
    $region3: #{tpu_custom_call.1} parent=1 // pred_check_branch
      %11 = sbr.rel (0) target = $region5
    $region4: #{tpu_custom_call.1} parent=1 // pred_region
      _
    $region5: #{tpu_custom_call.1} parent=1 // pred_fallthru
      _
    // Predicated region
    $region6: #{tpu_custom_call.1} parent=1 // pred_check
      _
    $region7: #{tpu_custom_call.1} parent=1 // pred_check_branch
      %13 = sbr.rel (0) target = $region9
    $region8: #{tpu_custom_call.1} parent=1 // pred_region
      %15 = vsyncadd [#allocation4], 0
      %s16 = sshll.u32 %s1, 4
      %s17 = int_to_ptr.hbm [resolvable:$true] %s16
      %s18 = sshll.u32 [#allocation3], 4
      %s19 = int_to_ptr.vmem [resolvable:$true] %s18
      %24 = dma.hbm_to_vmem [thread:$0]  %s17, 1024, %s19, [#allocation4], 512, 512, 32
    $region9: #{tpu_custom_call.1} parent=1 // pred_fallthru
      _
    // Predicated region
    $region10: #{tpu_custom_call.1} parent=1 // pred_check
      _
    $region11: #{tpu_custom_call.1} parent=1 // pred_check_branch
      %26 = sbr.rel (0) target = $region13
    $region12: #{tpu_custom_call.1} parent=1 // pred_region
      %28 = dma.done [#allocation4], 1024
    $region13: #{tpu_custom_call.1} parent=1 // pred_fallthru
      _
    %s29 = sld [smem:[#allocation2]]
    %s30 = smul.u32 0, 16
    %v31 = vlaneseq
    %v32 = vshrl.u32 %v31, 7
    %v33 = vlaneseq
    %v34 = vand.u32 %v33, 127
    %v35 = vadd.s32 %v34, 128
    %v36 = vadd.s32 %v34, 256
    %v37 = vadd.s32 %v34, 384
    %v38 = vstv %s30
    %v39 = vadd.s32 %v38, %v32
    %v40 = vmul.u32 %v39, 512
    %v41 = vadd.s32 %v40, %v34
    %v42 = vadd.s32 %v40, %v35
    %v43 = vadd.s32 %v40, %v36
    %v44 = vadd.s32 %v40, %v37
    %s45 = smul.u32 %s29, 2654435761
    %s46 = sadd.s32 %s45, 2135587861
    %s47 = smul.u32 %s29, 2246822519
    %s48 = sadd.s32 %s47, 374761393
    %v49 = vstv %s46
    %v50 = vxor.u32 %v41, %v49
    %v51 = vxor.u32 %v42, %v49
    %v52 = vxor.u32 %v43, %v49
    %v53 = vxor.u32 %v44, %v49
    %v54 = vshrl.u32 %v50, 16
    %v55 = vshrl.u32 %v51, 16
    %v56 = vshrl.u32 %v52, 16
    %v57 = vshrl.u32 %v53, 16
    %v58 = vxor.u32 %v50, %v54
    %v59 = vxor.u32 %v51, %v55
    %v60 = vxor.u32 %v52, %v56
    %v61 = vxor.u32 %v53, %v57
    %v62 = vmul.u32 %v58, 2146121005
    %v63 = vmul.u32 %v59, 2146121005
    %v64 = vmul.u32 %v60, 2146121005
    %v65 = vmul.u32 %v61, 2146121005
    %v66 = vshrl.u32 %v62, 15
    %v67 = vshrl.u32 %v63, 15
    %v68 = vshrl.u32 %v64, 15
    %v69 = vshrl.u32 %v65, 15
    %v70 = vxor.u32 %v62, %v66
    %v71 = vxor.u32 %v63, %v67
    %v72 = vxor.u32 %v64, %v68
    %v73 = vxor.u32 %v65, %v69
    %v74 = vmul.u32 %v70, 2221713035
    %v75 = vmul.u32 %v71, 2221713035
    %v76 = vmul.u32 %v72, 2221713035
    %v77 = vmul.u32 %v73, 2221713035
    %v78 = vshrl.u32 %v74, 16
    %v79 = vshrl.u32 %v75, 16
    %v80 = vshrl.u32 %v76, 16
    %v81 = vshrl.u32 %v77, 16
    %v82 = vxor.u32 %v74, %v78
    %v83 = vxor.u32 %v75, %v79
    %v84 = vxor.u32 %v76, %v80
    %v85 = vxor.u32 %v77, %v81
    %v86 = vadd.s32 %v41, 1759714724
    %v87 = vadd.s32 %v42, 1759714724
    %v88 = vadd.s32 %v43, 1759714724
    %v89 = vadd.s32 %v44, 1759714724
    %v90 = vstv %s48
    %v91 = vxor.u32 %v86, %v90
    %v92 = vxor.u32 %v87, %v90
    %v93 = vxor.u32 %v88, %v90
    %v94 = vxor.u32 %v89, %v90
    %v95 = vshrl.u32 %v91, 16
    %v96 = vshrl.u32 %v92, 16
    %v97 = vshrl.u32 %v93, 16
    %v98 = vshrl.u32 %v94, 16
    %v99 = vxor.u32 %v91, %v95
    %v100 = vxor.u32 %v92, %v96
    %v101 = vxor.u32 %v93, %v97
    %v102 = vxor.u32 %v94, %v98
    %v103 = vmul.u32 %v99, 2146121005
    %v104 = vmul.u32 %v100, 2146121005
    %v105 = vmul.u32 %v101, 2146121005
    %v106 = vmul.u32 %v102, 2146121005
    %v107 = vshrl.u32 %v103, 15
    %v108 = vshrl.u32 %v104, 15
    %v109 = vshrl.u32 %v105, 15
    %v110 = vshrl.u32 %v106, 15
    %v111 = vxor.u32 %v103, %v107
    %v112 = vxor.u32 %v104, %v108
    %v113 = vxor.u32 %v105, %v109
    %v114 = vxor.u32 %v106, %v110
    %v115 = vmul.u32 %v111, 2221713035
    %v116 = vmul.u32 %v112, 2221713035
    %v117 = vmul.u32 %v113, 2221713035
    %v118 = vmul.u32 %v114, 2221713035
    %v119 = vshrl.u32 %v115, 16
    %v120 = vshrl.u32 %v116, 16
    %v121 = vshrl.u32 %v117, 16
    %v122 = vshrl.u32 %v118, 16
    %v123 = vxor.u32 %v115, %v119
    %v124 = vxor.u32 %v116, %v120
    %v125 = vxor.u32 %v117, %v121
    %v126 = vxor.u32 %v118, %v122
    %v127 = vshrl.u32 %v82, 9
    %v128 = vshrl.u32 %v83, 9
    %v129 = vshrl.u32 %v84, 9
    %v130 = vshrl.u32 %v85, 9
    %v131 = vor.u32 %v127, 1065353216
    %v132 = vor.u32 %v128, 1065353216
    %v133 = vor.u32 %v129, 1065353216
    %v134 = vor.u32 %v130, 1065353216
    %v139 = vshrl.u32 %v123, 9
    %v140 = vshrl.u32 %v124, 9
    %v141 = vshrl.u32 %v125, 9
    %v142 = vshrl.u32 %v126, 9
    %v143 = vor.u32 %v139, 1065353216
    %v144 = vor.u32 %v140, 1065353216
    %v145 = vor.u32 %v141, 1065353216
    %v146 = vor.u32 %v142, 1065353216
    %v151 = vsub.f32 2.0, %v131
    %v152 = vsub.f32 2.0, %v132
    %v153 = vsub.f32 2.0, %v133
    %v154 = vsub.f32 2.0, %v134
    %v155 = vsub.f32 %v143, 1.0
    %v156 = vsub.f32 %v144, 1.0
    %v157 = vsub.f32 %v145, 1.0
    %v158 = vsub.f32 %v146, 1.0
    %v159 = vmul.f32 %v155, 6.2831855
    %v160 = vmul.f32 %v156, 6.2831855
    %v161 = vmul.f32 %v157, 6.2831855
    %v162 = vmul.f32 %v158, 6.2831855
    %v163 = vlog2.pop %v151
    %v164 = vmul.f32 %v163, 0.6931472
    %v165 = vlog2.pop %v152
    %v166 = vmul.f32 %v165, 0.6931472
    %v167 = vlog2.pop %v153
    %v168 = vmul.f32 %v167, 0.6931472
    %v169 = vlog2.pop %v154
    %v170 = vmul.f32 %v169, 0.6931472
    %v171 = vmul.f32 %v164, -2.0
    %v172 = vmul.f32 %v166, -2.0
    %v173 = vmul.f32 %v168, -2.0
    %v174 = vmul.f32 %v170, -2.0
    %v175 = vrsqrt.pop %v171
    %v176 = vmul.f32 %v175, %v171
    %v177 = vmul.f32 %v176, %v175
    %v178 = vmul.f32 0.5, %v177
    %v179 = vsub.f32 1.5, %v178
    %v180 = vmul.f32 %v175, %v179
    %v181 = vmul.f32 %v171, %v180
    %vm182 = vcmp.eq.f32.partialorder %v171, inf
    %v183 = vsel %vm182, %v171, %v181
    %vm184 = vcmp.eq.f32.partialorder %v171, 0.0
    %v185 = vand.u32 %v171, 2147483648
    %v186 = vsel %vm184, %v185, %v183
    %v187 = vrsqrt.pop %v172
    %v188 = vmul.f32 %v187, %v172
    %v189 = vmul.f32 %v188, %v187
    %v190 = vmul.f32 0.5, %v189
    %v191 = vsub.f32 1.5, %v190
    %v192 = vmul.f32 %v187, %v191
    %v193 = vmul.f32 %v172, %v192
    %vm194 = vcmp.eq.f32.partialorder %v172, inf
    %v195 = vsel %vm194, %v172, %v193
    %vm196 = vcmp.eq.f32.partialorder %v172, 0.0
    %v197 = vand.u32 %v172, 2147483648
    %v198 = vsel %vm196, %v197, %v195
    %v199 = vrsqrt.pop %v173
    %v200 = vmul.f32 %v199, %v173
    %v201 = vmul.f32 %v200, %v199
    %v202 = vmul.f32 0.5, %v201
    %v203 = vsub.f32 1.5, %v202
    %v204 = vmul.f32 %v199, %v203
    %v205 = vmul.f32 %v173, %v204
    %vm206 = vcmp.eq.f32.partialorder %v173, inf
    %v207 = vsel %vm206, %v173, %v205
    %vm208 = vcmp.eq.f32.partialorder %v173, 0.0
    %v209 = vand.u32 %v173, 2147483648
    %v210 = vsel %vm208, %v209, %v207
    %v211 = vrsqrt.pop %v174
    %v212 = vmul.f32 %v211, %v174
    %v213 = vmul.f32 %v212, %v211
    %v214 = vmul.f32 0.5, %v213
    %v215 = vsub.f32 1.5, %v214
    %v216 = vmul.f32 %v211, %v215
    %v217 = vmul.f32 %v174, %v216
    %vm218 = vcmp.eq.f32.partialorder %v174, inf
    %v219 = vsel %vm218, %v174, %v217
    %vm220 = vcmp.eq.f32.partialorder %v174, 0.0
    %v221 = vand.u32 %v174, 2147483648
    %v222 = vsel %vm220, %v221, %v219
    %v223 = vand.u32 2147483647, %v159
    %vm224 = vcmp.le.f32.partialorder %v223, 0.7853982
    %vm225 = vcmp.lt.s32.totalorder %v159, 0
    %v226 = vand.u32 %v159, 2139095040
    %v227 = vshrl.u32 %v226, 23
    %v228 = vsub.s32 %v227, 127
    %v229 = vand.u32 2147483647, %v159
    %v230 = vand.u32 %v229, 8388607
    %v231 = vor.u32 %v230, 8388608
    %v232 = vsub.s32 0, %v231
    %v233 = vadd.s32 %v228, 1
    %vm234 = vcmp.gt.s32.totalorder %v233, 0
    %v235 = vsel %vm234, %v233, 0
    %v236 = vshrl.u32 %v235, 5
    %v237 = vand.u32 %v235, 31
    %v238 = vsub.s32 32, %v237
    %v239 = vshrl.u32 683565275, %v238
    %v240 = vshll.u32 683565275, %v237
    %v241 = vshrl.u32 2475754826, %v238
    %v242 = vor.u32 %v240, %v241
    %v243 = vshll.u32 2475754826, %v237
    %v244 = vshrl.u32 2131351028, %v238
    %v245 = vor.u32 %v243, %v244
    %v246 = vshll.u32 2131351028, %v237
    %v247 = vshrl.u32 2102212464, %v238
    %v248 = vor.u32 %v246, %v247
    %v249 = vshll.u32 2102212464, %v237
    %v250 = vshrl.u32 920167782, %v238
    %v251 = vor.u32 %v249, %v250
    %v252 = vshll.u32 920167782, %v237
    %v253 = vshrl.u32 1326507024, %v238
    %v254 = vor.u32 %v252, %v253
    %vm255 = vcmp.lt.s32.totalorder %v236, 1
    %vm256 = vcmp.lt.s32.totalorder %v236, 2
    %vm257 = vcmp.lt.s32.totalorder %v236, 3
    %vm258 = vcmp.lt.s32.totalorder %v236, 4
    %v259 = vsel %vm255, %v239, %v242
    %v260 = vsel %vm258, %v248, 2102212464
    %v261 = vsel %vm257, %v245, %v260
    %v262 = vsel %vm256, %v259, %v261
    %v263 = vsel %vm255, %v242, %v245
    %v264 = vsel %vm258, %v251, 920167782
    %v265 = vsel %vm257, %v248, %v264
    %v266 = vsel %vm256, %v263, %v265
    %v267 = vsel %vm255, %v245, %v248
    %v268 = vsel %vm258, %v254, 1326507024
    %v269 = vsel %vm257, %v251, %v268
    %v270 = vsel %vm256, %v267, %v269
    %v271 = vshll.u32 %v231, 8
    %v272 = vand.u32 %v271, 65535
    %v273 = vshrl.u32 %v271, 16
    %v274 = vand.u32 %v270, 65535
    %v275 = vshrl.u32 %v270, 16
    %v276 = vmul.u32 %v272, %v274
    %v277 = vmul.u32 %v272, %v275
    %v278 = vmul.u32 %v273, %v274
    %v279 = vmul.u32 %v273, %v275
    %v280 = vshll.u32 %v277, 16
    %v281 = vshrl.u32 %v277, 16
    %v282 = vshll.u32 %v278, 16
    %v283 = vshrl.u32 %v278, 16
    %vm284 = vc.u32 %v276, %v280
    %v285 = vsel %vm284, 1, 0
    %v286 = vadd.s32 %v276, %v280
    %v287 = vadd.s32 %v279, %v285
    %vm288 = vc.u32 %v286, %v282
    %v289 = vsel %vm288, 1, 0
    %v290 = vadd.s32 %v286, %v282
    %v291 = vadd.s32 %v287, %v289
    %v292 = vadd.s32 %v291, %v281
    %v293 = vadd.s32 %v292, %v283
    %v294 = vand.u32 %v271, 65535
    %v295 = vshrl.u32 %v271, 16
    %v296 = vand.u32 %v266, 65535
    %v297 = vshrl.u32 %v266, 16
    %v298 = vmul.u32 %v294, %v296
    %v299 = vmul.u32 %v294, %v297
    %v300 = vmul.u32 %v295, %v296
    %v301 = vmul.u32 %v295, %v297
    %v302 = vshll.u32 %v299, 16
    %v303 = vshrl.u32 %v299, 16
    %v304 = vshll.u32 %v300, 16
    %v305 = vshrl.u32 %v300, 16
    %vm306 = vc.u32 %v298, %v302
    %v307 = vsel %vm306, 1, 0
    %v308 = vadd.s32 %v298, %v302
    %v309 = vadd.s32 %v301, %v307
    %vm310 = vc.u32 %v308, %v304
    %v311 = vsel %vm310, 1, 0
    %v312 = vadd.s32 %v308, %v304
    %v313 = vadd.s32 %v309, %v311
    %v314 = vadd.s32 %v313, %v303
    %v315 = vadd.s32 %v314, %v305
    %v316 = vmul.u32 %v271, %v262
    %v317 = vadd.s32 %v293, %v312
    %vm318 = vc.u32 %v293, %v312
    %v319 = vadd.s32 %v315, 1
    %v320 = vsel %vm318, %v319, %v315
    %v321 = vadd.s32 %v316, %v320
    %v322 = vadd.s32 %v321, 536870912
    %v323 = vshrl.u32 %v322, 30
    %v324 = vshll.u32 %v323, 30
    %v325 = vsub.s32 %v321, %v324
    %vm326 = vcmp.lt.s32.totalorder %v325, 0
    %v327 = vsub.s32 0, %v325
    %v328 = vsel %vm326, %v327, %v325
    %v329 = vclz %v328
    %v330 = vsub.s32 %v329, 2
    %vm331 = vcmp.gt.s32.totalorder 0, %v330
    %v332 = vsel %vm331, 0, %v330
    %v333 = vsub.s32 32, %v332
    %v334 = vshll.u32 %v325, %v332
    %v335 = vshrl.u32 %v317, %v333
    %v336 = vor.u32 %v334, %v335
    %v337 = vsub.s32 4294967266, %v332
    %v338 = vadd.s32 %v337, 127
    %v339 = vshll.u32 %v338, 23
    %v340 = vor.u32 4788187, %v339
    %v341 = vand.u32 2147483647, %v340
    %v343 = vcvt.s32.f32 %v336
    %v344 = vmul.f32 %v343, %v341
    %v345 = vxor.u32 %v344, 2147483648
    %v346 = vsel %vm225, %v345, %v344
    %v347 = vsub.s32 4, %v323
    %v348 = vsel %vm225, %v347, %v323
    %v349 = vsel %vm224, %v159, %v346
    %v350 = vsel %vm224, 0, %v348
    %v351 = vmul.f32 %v349, %v349
    %v352 = vmul.f32 %v351, -0.001358992
    %v353 = vadd.f32 %v352, 0.041655596
    %v354 = vmul.f32 %v351, %v353
    %v355 = vadd.f32 %v354, -0.4999988
    %v356 = vmul.f32 %v351, %v355
    %v357 = vadd.f32 1.0, %v356
    %v358 = vmul.f32 %v349, %v349
    %v359 = vmul.f32 %v358, -0.00019511016
    %v360 = vadd.f32 %v359, 0.008332121
    %v361 = vmul.f32 %v358, %v360
    %v362 = vadd.f32 %v361, -0.16666654
    %v363 = vmul.f32 %v358, %v362
    %v364 = vadd.f32 %v363, 1.0
    %v365 = vmul.f32 %v364, %v349
    %vm366 = vweird.f32 %v159
    %v367 = vand.u32 %v350, 3
    %vm368 = vcmp.lt.s32.totalorder %v367, 2
    %vm369 = vcmp.eq.s32.totalorder %v367, 0
    %v370 = vxor.u32 %v365, 2147483648
    %v371 = vsel %vm369, %v357, %v370
    %vm372 = vcmp.eq.s32.totalorder %v367, 2
    %v373 = vxor.u32 %v357, 2147483648
    %v374 = vsel %vm372, %v373, %v365
    %v375 = vsel %vm368, %v371, %v374
    %v376 = vsel %vm366, nan, %v375
    %v377 = vand.u32 2147483647, %v160
    %vm378 = vcmp.le.f32.partialorder %v377, 0.7853982
    %vm379 = vcmp.lt.s32.totalorder %v160, 0
    %v380 = vand.u32 %v160, 2139095040
    %v381 = vshrl.u32 %v380, 23
    %v382 = vsub.s32 %v381, 127
    %v383 = vand.u32 2147483647, %v160
    %v384 = vand.u32 %v383, 8388607
    %v385 = vor.u32 %v384, 8388608
    %v386 = vsub.s32 0, %v385
    %v387 = vadd.s32 %v382, 1
    %vm388 = vcmp.gt.s32.totalorder %v387, 0
    %v389 = vsel %vm388, %v387, 0
    %v390 = vshrl.u32 %v389, 5
    %v391 = vand.u32 %v389, 31
    %v392 = vsub.s32 32, %v391
    %v393 = vshrl.u32 683565275, %v392
    %v394 = vshll.u32 683565275, %v391
    %v395 = vshrl.u32 2475754826, %v392
    %v396 = vor.u32 %v394, %v395
    %v397 = vshll.u32 2475754826, %v391
    %v398 = vshrl.u32 2131351028, %v392
    %v399 = vor.u32 %v397, %v398
    %v400 = vshll.u32 2131351028, %v391
    %v401 = vshrl.u32 2102212464, %v392
    %v402 = vor.u32 %v400, %v401
    %v403 = vshll.u32 2102212464, %v391
    %v404 = vshrl.u32 920167782, %v392
    %v405 = vor.u32 %v403, %v404
    %v406 = vshll.u32 920167782, %v391
    %v407 = vshrl.u32 1326507024, %v392
    %v408 = vor.u32 %v406, %v407
    %vm409 = vcmp.lt.s32.totalorder %v390, 1
    %vm410 = vcmp.lt.s32.totalorder %v390, 2
    %vm411 = vcmp.lt.s32.totalorder %v390, 3
    %vm412 = vcmp.lt.s32.totalorder %v390, 4
    %v413 = vsel %vm409, %v393, %v396
    %v414 = vsel %vm412, %v402, 2102212464
    %v415 = vsel %vm411, %v399, %v414
    %v416 = vsel %vm410, %v413, %v415
    %v417 = vsel %vm409, %v396, %v399
    %v418 = vsel %vm412, %v405, 920167782
    %v419 = vsel %vm411, %v402, %v418
    %v420 = vsel %vm410, %v417, %v419
    %v421 = vsel %vm409, %v399, %v402
    %v422 = vsel %vm412, %v408, 1326507024
    %v423 = vsel %vm411, %v405, %v422
    %v424 = vsel %vm410, %v421, %v423
    %v425 = vshll.u32 %v385, 8
    %v426 = vand.u32 %v425, 65535
    %v427 = vshrl.u32 %v425, 16
    %v428 = vand.u32 %v424, 65535
    %v429 = vshrl.u32 %v424, 16
    %v430 = vmul.u32 %v426, %v428
    %v431 = vmul.u32 %v426, %v429
    %v432 = vmul.u32 %v427, %v428
    %v433 = vmul.u32 %v427, %v429
    %v434 = vshll.u32 %v431, 16
    %v435 = vshrl.u32 %v431, 16
    %v436 = vshll.u32 %v432, 16
    %v437 = vshrl.u32 %v432, 16
    %vm438 = vc.u32 %v430, %v434
    %v439 = vsel %vm438, 1, 0
    %v440 = vadd.s32 %v430, %v434
    %v441 = vadd.s32 %v433, %v439
    %vm442 = vc.u32 %v440, %v436
    %v443 = vsel %vm442, 1, 0
    %v444 = vadd.s32 %v440, %v436
    %v445 = vadd.s32 %v441, %v443
    %v446 = vadd.s32 %v445, %v435
    %v447 = vadd.s32 %v446, %v437
    %v448 = vand.u32 %v425, 65535
    %v449 = vshrl.u32 %v425, 16
    %v450 = vand.u32 %v420, 65535
    %v451 = vshrl.u32 %v420, 16
    %v452 = vmul.u32 %v448, %v450
    %v453 = vmul.u32 %v448, %v451
    %v454 = vmul.u32 %v449, %v450
    %v455 = vmul.u32 %v449, %v451
    %v456 = vshll.u32 %v453, 16
    %v457 = vshrl.u32 %v453, 16
    %v458 = vshll.u32 %v454, 16
    %v459 = vshrl.u32 %v454, 16
    %vm460 = vc.u32 %v452, %v456
    %v461 = vsel %vm460, 1, 0
    %v462 = vadd.s32 %v452, %v456
    %v463 = vadd.s32 %v455, %v461
    %vm464 = vc.u32 %v462, %v458
    %v465 = vsel %vm464, 1, 0
    %v466 = vadd.s32 %v462, %v458
    %v467 = vadd.s32 %v463, %v465
    %v468 = vadd.s32 %v467, %v457
    %v469 = vadd.s32 %v468, %v459
    %v470 = vmul.u32 %v425, %v416
    %v471 = vadd.s32 %v447, %v466
    %vm472 = vc.u32 %v447, %v466
    %v473 = vadd.s32 %v469, 1
    %v474 = vsel %vm472, %v473, %v469
    %v475 = vadd.s32 %v470, %v474
    %v476 = vadd.s32 %v475, 536870912
    %v477 = vshrl.u32 %v476, 30
    %v478 = vshll.u32 %v477, 30
    %v479 = vsub.s32 %v475, %v478
    %vm480 = vcmp.lt.s32.totalorder %v479, 0
    %v481 = vsub.s32 0, %v479
    %v482 = vsel %vm480, %v481, %v479
    %v483 = vclz %v482
    %v484 = vsub.s32 %v483, 2
    %vm485 = vcmp.gt.s32.totalorder 0, %v484
    %v486 = vsel %vm485, 0, %v484
    %v487 = vsub.s32 32, %v486
    %v488 = vshll.u32 %v479, %v486
    %v489 = vshrl.u32 %v471, %v487
    %v490 = vor.u32 %v488, %v489
    %v491 = vsub.s32 4294967266, %v486
    %v492 = vadd.s32 %v491, 127
    %v493 = vshll.u32 %v492, 23
    %v494 = vor.u32 4788187, %v493
    %v495 = vand.u32 2147483647, %v494
    %v497 = vcvt.s32.f32 %v490
    %v498 = vmul.f32 %v497, %v495
    %v499 = vxor.u32 %v498, 2147483648
    %v500 = vsel %vm379, %v499, %v498
    %v501 = vsub.s32 4, %v477
    %v502 = vsel %vm379, %v501, %v477
    %v503 = vsel %vm378, %v160, %v500
    %v504 = vsel %vm378, 0, %v502
    %v505 = vmul.f32 %v503, %v503
    %v506 = vmul.f32 %v505, -0.001358992
    %v507 = vadd.f32 %v506, 0.041655596
    %v508 = vmul.f32 %v505, %v507
    %v509 = vadd.f32 %v508, -0.4999988
    %v510 = vmul.f32 %v505, %v509
    %v511 = vadd.f32 1.0, %v510
    %v512 = vmul.f32 %v503, %v503
    %v513 = vmul.f32 %v512, -0.00019511016
    %v514 = vadd.f32 %v513, 0.008332121
    %v515 = vmul.f32 %v512, %v514
    %v516 = vadd.f32 %v515, -0.16666654
    %v517 = vmul.f32 %v512, %v516
    %v518 = vadd.f32 %v517, 1.0
    %v519 = vmul.f32 %v518, %v503
    %vm520 = vweird.f32 %v160
    %v521 = vand.u32 %v504, 3
    %vm522 = vcmp.lt.s32.totalorder %v521, 2
    %vm523 = vcmp.eq.s32.totalorder %v521, 0
    %v524 = vxor.u32 %v519, 2147483648
    %v525 = vsel %vm523, %v511, %v524
    %vm526 = vcmp.eq.s32.totalorder %v521, 2
    %v527 = vxor.u32 %v511, 2147483648
    %v528 = vsel %vm526, %v527, %v519
    %v529 = vsel %vm522, %v525, %v528
    %v530 = vsel %vm520, nan, %v529
    %v531 = vand.u32 2147483647, %v161
    %vm532 = vcmp.le.f32.partialorder %v531, 0.7853982
    %vm533 = vcmp.lt.s32.totalorder %v161, 0
    %v534 = vand.u32 %v161, 2139095040
    %v535 = vshrl.u32 %v534, 23
    %v536 = vsub.s32 %v535, 127
    %v537 = vand.u32 2147483647, %v161
    %v538 = vand.u32 %v537, 8388607
    %v539 = vor.u32 %v538, 8388608
    %v540 = vsub.s32 0, %v539
    %v541 = vadd.s32 %v536, 1
    %vm542 = vcmp.gt.s32.totalorder %v541, 0
    %v543 = vsel %vm542, %v541, 0
    %v544 = vshrl.u32 %v543, 5
    %v545 = vand.u32 %v543, 31
    %v546 = vsub.s32 32, %v545
    %v547 = vshrl.u32 683565275, %v546
    %v548 = vshll.u32 683565275, %v545
    %v549 = vshrl.u32 2475754826, %v546
    %v550 = vor.u32 %v548, %v549
    %v551 = vshll.u32 2475754826, %v545
    %v552 = vshrl.u32 2131351028, %v546
    %v553 = vor.u32 %v551, %v552
    %v554 = vshll.u32 2131351028, %v545
    %v555 = vshrl.u32 2102212464, %v546
    %v556 = vor.u32 %v554, %v555
    %v557 = vshll.u32 2102212464, %v545
    %v558 = vshrl.u32 920167782, %v546
    %v559 = vor.u32 %v557, %v558
    %v560 = vshll.u32 920167782, %v545
    %v561 = vshrl.u32 1326507024, %v546
    %v562 = vor.u32 %v560, %v561
    %vm563 = vcmp.lt.s32.totalorder %v544, 1
    %vm564 = vcmp.lt.s32.totalorder %v544, 2
    %vm565 = vcmp.lt.s32.totalorder %v544, 3
    %vm566 = vcmp.lt.s32.totalorder %v544, 4
    %v567 = vsel %vm563, %v547, %v550
    %v568 = vsel %vm566, %v556, 2102212464
    %v569 = vsel %vm565, %v553, %v568
    %v570 = vsel %vm564, %v567, %v569
    %v571 = vsel %vm563, %v550, %v553
    %v572 = vsel %vm566, %v559, 920167782
    %v573 = vsel %vm565, %v556, %v572
    %v574 = vsel %vm564, %v571, %v573
    %v575 = vsel %vm563, %v553, %v556
    %v576 = vsel %vm566, %v562, 1326507024
    %v577 = vsel %vm565, %v559, %v576
    %v578 = vsel %vm564, %v575, %v577
    %v579 = vshll.u32 %v539, 8
    %v580 = vand.u32 %v579, 65535
    %v581 = vshrl.u32 %v579, 16
    %v582 = vand.u32 %v578, 65535
    %v583 = vshrl.u32 %v578, 16
    %v584 = vmul.u32 %v580, %v582
    %v585 = vmul.u32 %v580, %v583
    %v586 = vmul.u32 %v581, %v582
    %v587 = vmul.u32 %v581, %v583
    %v588 = vshll.u32 %v585, 16
    %v589 = vshrl.u32 %v585, 16
    %v590 = vshll.u32 %v586, 16
    %v591 = vshrl.u32 %v586, 16
    %vm592 = vc.u32 %v584, %v588
    %v593 = vsel %vm592, 1, 0
    %v594 = vadd.s32 %v584, %v588
    %v595 = vadd.s32 %v587, %v593
    %vm596 = vc.u32 %v594, %v590
    %v597 = vsel %vm596, 1, 0
    %v598 = vadd.s32 %v594, %v590
    %v599 = vadd.s32 %v595, %v597
    %v600 = vadd.s32 %v599, %v589
    %v601 = vadd.s32 %v600, %v591
    %v602 = vand.u32 %v579, 65535
    %v603 = vshrl.u32 %v579, 16
    %v604 = vand.u32 %v574, 65535
    %v605 = vshrl.u32 %v574, 16
    %v606 = vmul.u32 %v602, %v604
    %v607 = vmul.u32 %v602, %v605
    %v608 = vmul.u32 %v603, %v604
    %v609 = vmul.u32 %v603, %v605
    %v610 = vshll.u32 %v607, 16
    %v611 = vshrl.u32 %v607, 16
    %v612 = vshll.u32 %v608, 16
    %v613 = vshrl.u32 %v608, 16
    %vm614 = vc.u32 %v606, %v610
    %v615 = vsel %vm614, 1, 0
    %v616 = vadd.s32 %v606, %v610
    %v617 = vadd.s32 %v609, %v615
    %vm618 = vc.u32 %v616, %v612
    %v619 = vsel %vm618, 1, 0
    %v620 = vadd.s32 %v616, %v612
    %v621 = vadd.s32 %v617, %v619
    %v622 = vadd.s32 %v621, %v611
    %v623 = vadd.s32 %v622, %v613
    %v624 = vmul.u32 %v579, %v570
    %v625 = vadd.s32 %v601, %v620
    %vm626 = vc.u32 %v601, %v620
    %v627 = vadd.s32 %v623, 1
    %v628 = vsel %vm626, %v627, %v623
    %v629 = vadd.s32 %v624, %v628
    %v630 = vadd.s32 %v629, 536870912
    %v631 = vshrl.u32 %v630, 30
    %v632 = vshll.u32 %v631, 30
    %v633 = vsub.s32 %v629, %v632
    %vm634 = vcmp.lt.s32.totalorder %v633, 0
    %v635 = vsub.s32 0, %v633
    %v636 = vsel %vm634, %v635, %v633
    %v637 = vclz %v636
    %v638 = vsub.s32 %v637, 2
    %vm639 = vcmp.gt.s32.totalorder 0, %v638
    %v640 = vsel %vm639, 0, %v638
    %v641 = vsub.s32 32, %v640
    %v642 = vshll.u32 %v633, %v640
    %v643 = vshrl.u32 %v625, %v641
    %v644 = vor.u32 %v642, %v643
    %v645 = vsub.s32 4294967266, %v640
    %v646 = vadd.s32 %v645, 127
    %v647 = vshll.u32 %v646, 23
    %v648 = vor.u32 4788187, %v647
    %v649 = vand.u32 2147483647, %v648
    %v651 = vcvt.s32.f32 %v644
    %v652 = vmul.f32 %v651, %v649
    %v653 = vxor.u32 %v652, 2147483648
    %v654 = vsel %vm533, %v653, %v652
    %v655 = vsub.s32 4, %v631
    %v656 = vsel %vm533, %v655, %v631
    %v657 = vsel %vm532, %v161, %v654
    %v658 = vsel %vm532, 0, %v656
    %v659 = vmul.f32 %v657, %v657
    %v660 = vmul.f32 %v659, -0.001358992
    %v661 = vadd.f32 %v660, 0.041655596
    %v662 = vmul.f32 %v659, %v661
    %v663 = vadd.f32 %v662, -0.4999988
    %v664 = vmul.f32 %v659, %v663
    %v665 = vadd.f32 1.0, %v664
    %v666 = vmul.f32 %v657, %v657
    %v667 = vmul.f32 %v666, -0.00019511016
    %v668 = vadd.f32 %v667, 0.008332121
    %v669 = vmul.f32 %v666, %v668
    %v670 = vadd.f32 %v669, -0.16666654
    %v671 = vmul.f32 %v666, %v670
    %v672 = vadd.f32 %v671, 1.0
    %v673 = vmul.f32 %v672, %v657
    %vm674 = vweird.f32 %v161
    %v675 = vand.u32 %v658, 3
    %vm676 = vcmp.lt.s32.totalorder %v675, 2
    %vm677 = vcmp.eq.s32.totalorder %v675, 0
    %v678 = vxor.u32 %v673, 2147483648
    %v679 = vsel %vm677, %v665, %v678
    %vm680 = vcmp.eq.s32.totalorder %v675, 2
    %v681 = vxor.u32 %v665, 2147483648
    %v682 = vsel %vm680, %v681, %v673
    %v683 = vsel %vm676, %v679, %v682
    %v684 = vsel %vm674, nan, %v683
    %v685 = vand.u32 2147483647, %v162
    %vm686 = vcmp.le.f32.partialorder %v685, 0.7853982
    %vm687 = vcmp.lt.s32.totalorder %v162, 0
    %v688 = vand.u32 %v162, 2139095040
    %v689 = vshrl.u32 %v688, 23
    %v690 = vsub.s32 %v689, 127
    %v691 = vand.u32 2147483647, %v162
    %v692 = vand.u32 %v691, 8388607
    %v693 = vor.u32 %v692, 8388608
    %v694 = vsub.s32 0, %v693
    %v695 = vadd.s32 %v690, 1
    %vm696 = vcmp.gt.s32.totalorder %v695, 0
    %v697 = vsel %vm696, %v695, 0
    %v698 = vshrl.u32 %v697, 5
    %v699 = vand.u32 %v697, 31
    %v700 = vsub.s32 32, %v699
    %v701 = vshrl.u32 683565275, %v700
    %v702 = vshll.u32 683565275, %v699
    %v703 = vshrl.u32 2475754826, %v700
    %v704 = vor.u32 %v702, %v703
    %v705 = vshll.u32 2475754826, %v699
    %v706 = vshrl.u32 2131351028, %v700
    %v707 = vor.u32 %v705, %v706
    %v708 = vshll.u32 2131351028, %v699
    %v709 = vshrl.u32 2102212464, %v700
    %v710 = vor.u32 %v708, %v709
    %v711 = vshll.u32 2102212464, %v699
    %v712 = vshrl.u32 920167782, %v700
    %v713 = vor.u32 %v711, %v712
    %v714 = vshll.u32 920167782, %v699
    %v715 = vshrl.u32 1326507024, %v700
    %v716 = vor.u32 %v714, %v715
    %vm717 = vcmp.lt.s32.totalorder %v698, 1
    %vm718 = vcmp.lt.s32.totalorder %v698, 2
    %vm719 = vcmp.lt.s32.totalorder %v698, 3
    %vm720 = vcmp.lt.s32.totalorder %v698, 4
    %v721 = vsel %vm717, %v701, %v704
    %v722 = vsel %vm720, %v710, 2102212464
    %v723 = vsel %vm719, %v707, %v722
    %v724 = vsel %vm718, %v721, %v723
    %v725 = vsel %vm717, %v704, %v707
    %v726 = vsel %vm720, %v713, 920167782
    %v727 = vsel %vm719, %v710, %v726
    %v728 = vsel %vm718, %v725, %v727
    %v729 = vsel %vm717, %v707, %v710
    %v730 = vsel %vm720, %v716, 1326507024
    %v731 = vsel %vm719, %v713, %v730
    %v732 = vsel %vm718, %v729, %v731
    %v733 = vshll.u32 %v693, 8
    %v734 = vand.u32 %v733, 65535
    %v735 = vshrl.u32 %v733, 16
    %v736 = vand.u32 %v732, 65535
    %v737 = vshrl.u32 %v732, 16
    %v738 = vmul.u32 %v734, %v736
    %v739 = vmul.u32 %v734, %v737
    %v740 = vmul.u32 %v735, %v736
    %v741 = vmul.u32 %v735, %v737
    %v742 = vshll.u32 %v739, 16
    %v743 = vshrl.u32 %v739, 16
    %v744 = vshll.u32 %v740, 16
    %v745 = vshrl.u32 %v740, 16
    %vm746 = vc.u32 %v738, %v742
    %v747 = vsel %vm746, 1, 0
    %v748 = vadd.s32 %v738, %v742
    %v749 = vadd.s32 %v741, %v747
    %vm750 = vc.u32 %v748, %v744
    %v751 = vsel %vm750, 1, 0
    %v752 = vadd.s32 %v748, %v744
    %v753 = vadd.s32 %v749, %v751
    %v754 = vadd.s32 %v753, %v743
    %v755 = vadd.s32 %v754, %v745
    %v756 = vand.u32 %v733, 65535
    %v757 = vshrl.u32 %v733, 16
    %v758 = vand.u32 %v728, 65535
    %v759 = vshrl.u32 %v728, 16
    %v760 = vmul.u32 %v756, %v758
    %v761 = vmul.u32 %v756, %v759
    %v762 = vmul.u32 %v757, %v758
    %v763 = vmul.u32 %v757, %v759
    %v764 = vshll.u32 %v761, 16
    %v765 = vshrl.u32 %v761, 16
    %v766 = vshll.u32 %v762, 16
    %v767 = vshrl.u32 %v762, 16
    %vm768 = vc.u32 %v760, %v764
    %v769 = vsel %vm768, 1, 0
    %v770 = vadd.s32 %v760, %v764
    %v771 = vadd.s32 %v763, %v769
    %vm772 = vc.u32 %v770, %v766
    %v773 = vsel %vm772, 1, 0
    %v774 = vadd.s32 %v770, %v766
    %v775 = vadd.s32 %v771, %v773
    %v776 = vadd.s32 %v775, %v765
    %v777 = vadd.s32 %v776, %v767
    %v778 = vmul.u32 %v733, %v724
    %v779 = vadd.s32 %v755, %v774
    %vm780 = vc.u32 %v755, %v774
    %v781 = vadd.s32 %v777, 1
    %v782 = vsel %vm780, %v781, %v777
    %v783 = vadd.s32 %v778, %v782
    %v784 = vadd.s32 %v783, 536870912
    %v785 = vshrl.u32 %v784, 30
    %v786 = vshll.u32 %v785, 30
    %v787 = vsub.s32 %v783, %v786
    %vm788 = vcmp.lt.s32.totalorder %v787, 0
    %v789 = vsub.s32 0, %v787
    %v790 = vsel %vm788, %v789, %v787
    %v791 = vclz %v790
    %v792 = vsub.s32 %v791, 2
    %vm793 = vcmp.gt.s32.totalorder 0, %v792
    %v794 = vsel %vm793, 0, %v792
    %v795 = vsub.s32 32, %v794
    %v796 = vshll.u32 %v787, %v794
    %v797 = vshrl.u32 %v779, %v795
    %v798 = vor.u32 %v796, %v797
    %v799 = vsub.s32 4294967266, %v794
    %v800 = vadd.s32 %v799, 127
    %v801 = vshll.u32 %v800, 23
    %v802 = vor.u32 4788187, %v801
    %v803 = vand.u32 2147483647, %v802
    %v805 = vcvt.s32.f32 %v798
    %v806 = vmul.f32 %v805, %v803
    %v807 = vxor.u32 %v806, 2147483648
    %v808 = vsel %vm687, %v807, %v806
    %v809 = vsub.s32 4, %v785
    %v810 = vsel %vm687, %v809, %v785
    %v811 = vsel %vm686, %v162, %v808
    %v812 = vsel %vm686, 0, %v810
    %v813 = vmul.f32 %v811, %v811
    %v814 = vmul.f32 %v813, -0.001358992
    %v815 = vadd.f32 %v814, 0.041655596
    %v816 = vmul.f32 %v813, %v815
    %v817 = vadd.f32 %v816, -0.4999988
    %v818 = vmul.f32 %v813, %v817
    %v819 = vadd.f32 1.0, %v818
    %v820 = vmul.f32 %v811, %v811
    %v821 = vmul.f32 %v820, -0.00019511016
    %v822 = vadd.f32 %v821, 0.008332121
    %v823 = vmul.f32 %v820, %v822
    %v824 = vadd.f32 %v823, -0.16666654
    %v825 = vmul.f32 %v820, %v824
    %v826 = vadd.f32 %v825, 1.0
    %v827 = vmul.f32 %v826, %v811
    %vm828 = vweird.f32 %v162
    %v829 = vand.u32 %v812, 3
    %vm830 = vcmp.lt.s32.totalorder %v829, 2
    %vm831 = vcmp.eq.s32.totalorder %v829, 0
    %v832 = vxor.u32 %v827, 2147483648
    %v833 = vsel %vm831, %v819, %v832
    %vm834 = vcmp.eq.s32.totalorder %v829, 2
    %v835 = vxor.u32 %v819, 2147483648
    %v836 = vsel %vm834, %v835, %v827
    %v837 = vsel %vm830, %v833, %v836
    %v838 = vsel %vm828, nan, %v837
    %v839 = vmul.f32 %v186, %v376
    %v840 = vmul.f32 %v198, %v530
    %v841 = vmul.f32 %v210, %v684
    %v842 = vmul.f32 %v222, %v838
    %v843 = vand.u32 2147483647, %v159
    %vm844 = vcmp.le.f32.partialorder %v843, 0.7853982
    %vm845 = vcmp.lt.s32.totalorder %v159, 0
    %v846 = vand.u32 %v159, 2139095040
    %v847 = vshrl.u32 %v846, 23
    %v848 = vsub.s32 %v847, 127
    %v849 = vand.u32 2147483647, %v159
    %v850 = vand.u32 %v849, 8388607
    %v851 = vor.u32 %v850, 8388608
    %v852 = vsub.s32 0, %v851
    %v853 = vadd.s32 %v848, 1
    %vm854 = vcmp.gt.s32.totalorder %v853, 0
    %v855 = vsel %vm854, %v853, 0
    %v856 = vshrl.u32 %v855, 5
    %v857 = vand.u32 %v855, 31
    %v858 = vsub.s32 32, %v857
    %v859 = vshrl.u32 683565275, %v858
    %v860 = vshll.u32 683565275, %v857
    %v861 = vshrl.u32 2475754826, %v858
    %v862 = vor.u32 %v860, %v861
    %v863 = vshll.u32 2475754826, %v857
    %v864 = vshrl.u32 2131351028, %v858
    %v865 = vor.u32 %v863, %v864
    %v866 = vshll.u32 2131351028, %v857
    %v867 = vshrl.u32 2102212464, %v858
    %v868 = vor.u32 %v866, %v867
    %v869 = vshll.u32 2102212464, %v857
    %v870 = vshrl.u32 920167782, %v858
    %v871 = vor.u32 %v869, %v870
    %v872 = vshll.u32 920167782, %v857
    %v873 = vshrl.u32 1326507024, %v858
    %v874 = vor.u32 %v872, %v873
    %vm875 = vcmp.lt.s32.totalorder %v856, 1
    %vm876 = vcmp.lt.s32.totalorder %v856, 2
    %vm877 = vcmp.lt.s32.totalorder %v856, 3
    %vm878 = vcmp.lt.s32.totalorder %v856, 4
    %v879 = vsel %vm875, %v859, %v862
    %v880 = vsel %vm878, %v868, 2102212464
    %v881 = vsel %vm877, %v865, %v880
    %v882 = vsel %vm876, %v879, %v881
    %v883 = vsel %vm875, %v862, %v865
    %v884 = vsel %vm878, %v871, 920167782
    %v885 = vsel %vm877, %v868, %v884
    %v886 = vsel %vm876, %v883, %v885
    %v887 = vsel %vm875, %v865, %v868
    %v888 = vsel %vm878, %v874, 1326507024
    %v889 = vsel %vm877, %v871, %v888
    %v890 = vsel %vm876, %v887, %v889
    %v891 = vshll.u32 %v851, 8
    %v892 = vand.u32 %v891, 65535
    %v893 = vshrl.u32 %v891, 16
    %v894 = vand.u32 %v890, 65535
    %v895 = vshrl.u32 %v890, 16
    %v896 = vmul.u32 %v892, %v894
    %v897 = vmul.u32 %v892, %v895
    %v898 = vmul.u32 %v893, %v894
    %v899 = vmul.u32 %v893, %v895
    %v900 = vshll.u32 %v897, 16
    %v901 = vshrl.u32 %v897, 16
    %v902 = vshll.u32 %v898, 16
    %v903 = vshrl.u32 %v898, 16
    %vm904 = vc.u32 %v896, %v900
    %v905 = vsel %vm904, 1, 0
    %v906 = vadd.s32 %v896, %v900
    %v907 = vadd.s32 %v899, %v905
    %vm908 = vc.u32 %v906, %v902
    %v909 = vsel %vm908, 1, 0
    %v910 = vadd.s32 %v906, %v902
    %v911 = vadd.s32 %v907, %v909
    %v912 = vadd.s32 %v911, %v901
    %v913 = vadd.s32 %v912, %v903
    %v914 = vand.u32 %v891, 65535
    %v915 = vshrl.u32 %v891, 16
    %v916 = vand.u32 %v886, 65535
    %v917 = vshrl.u32 %v886, 16
    %v918 = vmul.u32 %v914, %v916
    %v919 = vmul.u32 %v914, %v917
    %v920 = vmul.u32 %v915, %v916
    %v921 = vmul.u32 %v915, %v917
    %v922 = vshll.u32 %v919, 16
    %v923 = vshrl.u32 %v919, 16
    %v924 = vshll.u32 %v920, 16
    %v925 = vshrl.u32 %v920, 16
    %vm926 = vc.u32 %v918, %v922
    %v927 = vsel %vm926, 1, 0
    %v928 = vadd.s32 %v918, %v922
    %v929 = vadd.s32 %v921, %v927
    %vm930 = vc.u32 %v928, %v924
    %v931 = vsel %vm930, 1, 0
    %v932 = vadd.s32 %v928, %v924
    %v933 = vadd.s32 %v929, %v931
    %v934 = vadd.s32 %v933, %v923
    %v935 = vadd.s32 %v934, %v925
    %v936 = vmul.u32 %v891, %v882
    %v937 = vadd.s32 %v913, %v932
    %vm938 = vc.u32 %v913, %v932
    %v939 = vadd.s32 %v935, 1
    %v940 = vsel %vm938, %v939, %v935
    %v941 = vadd.s32 %v936, %v940
    %v942 = vadd.s32 %v941, 536870912
    %v943 = vshrl.u32 %v942, 30
    %v944 = vshll.u32 %v943, 30
    %v945 = vsub.s32 %v941, %v944
    %vm946 = vcmp.lt.s32.totalorder %v945, 0
    %v947 = vsub.s32 0, %v945
    %v948 = vsel %vm946, %v947, %v945
    %v949 = vclz %v948
    %v950 = vsub.s32 %v949, 2
    %vm951 = vcmp.gt.s32.totalorder 0, %v950
    %v952 = vsel %vm951, 0, %v950
    %v953 = vsub.s32 32, %v952
    %v954 = vshll.u32 %v945, %v952
    %v955 = vshrl.u32 %v937, %v953
    %v956 = vor.u32 %v954, %v955
    %v957 = vsub.s32 4294967266, %v952
    %v958 = vadd.s32 %v957, 127
    %v959 = vshll.u32 %v958, 23
    %v960 = vor.u32 4788187, %v959
    %v961 = vand.u32 2147483647, %v960
    %v963 = vcvt.s32.f32 %v956
    %v964 = vmul.f32 %v963, %v961
    %v965 = vxor.u32 %v964, 2147483648
    %v966 = vsel %vm845, %v965, %v964
    %v967 = vsub.s32 4, %v943
    %v968 = vsel %vm845, %v967, %v943
    %v969 = vsel %vm844, %v159, %v966
    %v970 = vsel %vm844, 0, %v968
    %v971 = vmul.f32 %v969, %v969
    %v972 = vmul.f32 %v971, -0.001358992
    %v973 = vadd.f32 %v972, 0.041655596
    %v974 = vmul.f32 %v971, %v973
    %v975 = vadd.f32 %v974, -0.4999988
    %v976 = vmul.f32 %v971, %v975
    %v977 = vadd.f32 1.0, %v976
    %v978 = vmul.f32 %v969, %v969
    %v979 = vmul.f32 %v978, -0.00019511016
    %v980 = vadd.f32 %v979, 0.008332121
    %v981 = vmul.f32 %v978, %v980
    %v982 = vadd.f32 %v981, -0.16666654
    %v983 = vmul.f32 %v978, %v982
    %v984 = vadd.f32 %v983, 1.0
    %v985 = vmul.f32 %v984, %v969
    %vm986 = vweird.f32 %v159
    %v987 = vadd.s32 %v970, 3
    %v988 = vand.u32 %v987, 3
    %vm989 = vcmp.lt.s32.totalorder %v988, 2
    %vm990 = vcmp.eq.s32.totalorder %v988, 0
    %v991 = vxor.u32 %v985, 2147483648
    %v992 = vsel %vm990, %v977, %v991
    %vm993 = vcmp.eq.s32.totalorder %v988, 2
    %v994 = vxor.u32 %v977, 2147483648
    %v995 = vsel %vm993, %v994, %v985
    %v996 = vsel %vm989, %v992, %v995
    %v997 = vsel %vm986, nan, %v996
    %v998 = vand.u32 2147483647, %v160
    %vm999 = vcmp.le.f32.partialorder %v998, 0.7853982
    %vm1000 = vcmp.lt.s32.totalorder %v160, 0
    %v1001 = vand.u32 %v160, 2139095040
    %v1002 = vshrl.u32 %v1001, 23
    %v1003 = vsub.s32 %v1002, 127
    %v1004 = vand.u32 2147483647, %v160
    %v1005 = vand.u32 %v1004, 8388607
    %v1006 = vor.u32 %v1005, 8388608
    %v1007 = vsub.s32 0, %v1006
    %v1008 = vadd.s32 %v1003, 1
    %vm1009 = vcmp.gt.s32.totalorder %v1008, 0
    %v1010 = vsel %vm1009, %v1008, 0
    %v1011 = vshrl.u32 %v1010, 5
    %v1012 = vand.u32 %v1010, 31
    %v1013 = vsub.s32 32, %v1012
    %v1014 = vshrl.u32 683565275, %v1013
    %v1015 = vshll.u32 683565275, %v1012
    %v1016 = vshrl.u32 2475754826, %v1013
    %v1017 = vor.u32 %v1015, %v1016
    %v1018 = vshll.u32 2475754826, %v1012
    %v1019 = vshrl.u32 2131351028, %v1013
    %v1020 = vor.u32 %v1018, %v1019
    %v1021 = vshll.u32 2131351028, %v1012
    %v1022 = vshrl.u32 2102212464, %v1013
    %v1023 = vor.u32 %v1021, %v1022
    %v1024 = vshll.u32 2102212464, %v1012
    %v1025 = vshrl.u32 920167782, %v1013
    %v1026 = vor.u32 %v1024, %v1025
    %v1027 = vshll.u32 920167782, %v1012
    %v1028 = vshrl.u32 1326507024, %v1013
    %v1029 = vor.u32 %v1027, %v1028
    %vm1030 = vcmp.lt.s32.totalorder %v1011, 1
    %vm1031 = vcmp.lt.s32.totalorder %v1011, 2
    %vm1032 = vcmp.lt.s32.totalorder %v1011, 3
    %vm1033 = vcmp.lt.s32.totalorder %v1011, 4
    %v1034 = vsel %vm1030, %v1014, %v1017
    %v1035 = vsel %vm1033, %v1023, 2102212464
    %v1036 = vsel %vm1032, %v1020, %v1035
    %v1037 = vsel %vm1031, %v1034, %v1036
    %v1038 = vsel %vm1030, %v1017, %v1020
    %v1039 = vsel %vm1033, %v1026, 920167782
    %v1040 = vsel %vm1032, %v1023, %v1039
    %v1041 = vsel %vm1031, %v1038, %v1040
    %v1042 = vsel %vm1030, %v1020, %v1023
    %v1043 = vsel %vm1033, %v1029, 1326507024
    %v1044 = vsel %vm1032, %v1026, %v1043
    %v1045 = vsel %vm1031, %v1042, %v1044
    %v1046 = vshll.u32 %v1006, 8
    %v1047 = vand.u32 %v1046, 65535
    %v1048 = vshrl.u32 %v1046, 16
    %v1049 = vand.u32 %v1045, 65535
    %v1050 = vshrl.u32 %v1045, 16
    %v1051 = vmul.u32 %v1047, %v1049
    %v1052 = vmul.u32 %v1047, %v1050
    %v1053 = vmul.u32 %v1048, %v1049
    %v1054 = vmul.u32 %v1048, %v1050
    %v1055 = vshll.u32 %v1052, 16
    %v1056 = vshrl.u32 %v1052, 16
    %v1057 = vshll.u32 %v1053, 16
    %v1058 = vshrl.u32 %v1053, 16
    %vm1059 = vc.u32 %v1051, %v1055
    %v1060 = vsel %vm1059, 1, 0
    %v1061 = vadd.s32 %v1051, %v1055
    %v1062 = vadd.s32 %v1054, %v1060
    %vm1063 = vc.u32 %v1061, %v1057
    %v1064 = vsel %vm1063, 1, 0
    %v1065 = vadd.s32 %v1061, %v1057
    %v1066 = vadd.s32 %v1062, %v1064
    %v1067 = vadd.s32 %v1066, %v1056
    %v1068 = vadd.s32 %v1067, %v1058
    %v1069 = vand.u32 %v1046, 65535
    %v1070 = vshrl.u32 %v1046, 16
    %v1071 = vand.u32 %v1041, 65535
    %v1072 = vshrl.u32 %v1041, 16
    %v1073 = vmul.u32 %v1069, %v1071
    %v1074 = vmul.u32 %v1069, %v1072
    %v1075 = vmul.u32 %v1070, %v1071
    %v1076 = vmul.u32 %v1070, %v1072
    %v1077 = vshll.u32 %v1074, 16
    %v1078 = vshrl.u32 %v1074, 16
    %v1079 = vshll.u32 %v1075, 16
    %v1080 = vshrl.u32 %v1075, 16
    %vm1081 = vc.u32 %v1073, %v1077
    %v1082 = vsel %vm1081, 1, 0
    %v1083 = vadd.s32 %v1073, %v1077
    %v1084 = vadd.s32 %v1076, %v1082
    %vm1085 = vc.u32 %v1083, %v1079
    %v1086 = vsel %vm1085, 1, 0
    %v1087 = vadd.s32 %v1083, %v1079
    %v1088 = vadd.s32 %v1084, %v1086
    %v1089 = vadd.s32 %v1088, %v1078
    %v1090 = vadd.s32 %v1089, %v1080
    %v1091 = vmul.u32 %v1046, %v1037
    %v1092 = vadd.s32 %v1068, %v1087
    %vm1093 = vc.u32 %v1068, %v1087
    %v1094 = vadd.s32 %v1090, 1
    %v1095 = vsel %vm1093, %v1094, %v1090
    %v1096 = vadd.s32 %v1091, %v1095
    %v1097 = vadd.s32 %v1096, 536870912
    %v1098 = vshrl.u32 %v1097, 30
    %v1099 = vshll.u32 %v1098, 30
    %v1100 = vsub.s32 %v1096, %v1099
    %vm1101 = vcmp.lt.s32.totalorder %v1100, 0
    %v1102 = vsub.s32 0, %v1100
    %v1103 = vsel %vm1101, %v1102, %v1100
    %v1104 = vclz %v1103
    %v1105 = vsub.s32 %v1104, 2
    %vm1106 = vcmp.gt.s32.totalorder 0, %v1105
    %v1107 = vsel %vm1106, 0, %v1105
    %v1108 = vsub.s32 32, %v1107
    %v1109 = vshll.u32 %v1100, %v1107
    %v1110 = vshrl.u32 %v1092, %v1108
    %v1111 = vor.u32 %v1109, %v1110
    %v1112 = vsub.s32 4294967266, %v1107
    %v1113 = vadd.s32 %v1112, 127
    %v1114 = vshll.u32 %v1113, 23
    %v1115 = vor.u32 4788187, %v1114
    %v1116 = vand.u32 2147483647, %v1115
    %v1118 = vcvt.s32.f32 %v1111
    %v1119 = vmul.f32 %v1118, %v1116
    %v1120 = vxor.u32 %v1119, 2147483648
    %v1121 = vsel %vm1000, %v1120, %v1119
    %v1122 = vsub.s32 4, %v1098
    %v1123 = vsel %vm1000, %v1122, %v1098
    %v1124 = vsel %vm999, %v160, %v1121
    %v1125 = vsel %vm999, 0, %v1123
    %v1126 = vmul.f32 %v1124, %v1124
    %v1127 = vmul.f32 %v1126, -0.001358992
    %v1128 = vadd.f32 %v1127, 0.041655596
    %v1129 = vmul.f32 %v1126, %v1128
    %v1130 = vadd.f32 %v1129, -0.4999988
    %v1131 = vmul.f32 %v1126, %v1130
    %v1132 = vadd.f32 1.0, %v1131
    %v1133 = vmul.f32 %v1124, %v1124
    %v1134 = vmul.f32 %v1133, -0.00019511016
    %v1135 = vadd.f32 %v1134, 0.008332121
    %v1136 = vmul.f32 %v1133, %v1135
    %v1137 = vadd.f32 %v1136, -0.16666654
    %v1138 = vmul.f32 %v1133, %v1137
    %v1139 = vadd.f32 %v1138, 1.0
    %v1140 = vmul.f32 %v1139, %v1124
    %vm1141 = vweird.f32 %v160
    %v1142 = vadd.s32 %v1125, 3
    %v1143 = vand.u32 %v1142, 3
    %vm1144 = vcmp.lt.s32.totalorder %v1143, 2
    %vm1145 = vcmp.eq.s32.totalorder %v1143, 0
    %v1146 = vxor.u32 %v1140, 2147483648
    %v1147 = vsel %vm1145, %v1132, %v1146
    %vm1148 = vcmp.eq.s32.totalorder %v1143, 2
    %v1149 = vxor.u32 %v1132, 2147483648
    %v1150 = vsel %vm1148, %v1149, %v1140
    %v1151 = vsel %vm1144, %v1147, %v1150
    %v1152 = vsel %vm1141, nan, %v1151
    %v1153 = vand.u32 2147483647, %v161
    %vm1154 = vcmp.le.f32.partialorder %v1153, 0.7853982
    %vm1155 = vcmp.lt.s32.totalorder %v161, 0
    %v1156 = vand.u32 %v161, 2139095040
    %v1157 = vshrl.u32 %v1156, 23
    %v1158 = vsub.s32 %v1157, 127
    %v1159 = vand.u32 2147483647, %v161
    %v1160 = vand.u32 %v1159, 8388607
    %v1161 = vor.u32 %v1160, 8388608
    %v1162 = vsub.s32 0, %v1161
    %v1163 = vadd.s32 %v1158, 1
    %vm1164 = vcmp.gt.s32.totalorder %v1163, 0
    %v1165 = vsel %vm1164, %v1163, 0
    %v1166 = vshrl.u32 %v1165, 5
    %v1167 = vand.u32 %v1165, 31
    %v1168 = vsub.s32 32, %v1167
    %v1169 = vshrl.u32 683565275, %v1168
    %v1170 = vshll.u32 683565275, %v1167
    %v1171 = vshrl.u32 2475754826, %v1168
    %v1172 = vor.u32 %v1170, %v1171
    %v1173 = vshll.u32 2475754826, %v1167
    %v1174 = vshrl.u32 2131351028, %v1168
    %v1175 = vor.u32 %v1173, %v1174
    %v1176 = vshll.u32 2131351028, %v1167
    %v1177 = vshrl.u32 2102212464, %v1168
    %v1178 = vor.u32 %v1176, %v1177
    %v1179 = vshll.u32 2102212464, %v1167
    %v1180 = vshrl.u32 920167782, %v1168
    %v1181 = vor.u32 %v1179, %v1180
    %v1182 = vshll.u32 920167782, %v1167
    %v1183 = vshrl.u32 1326507024, %v1168
    %v1184 = vor.u32 %v1182, %v1183
    %vm1185 = vcmp.lt.s32.totalorder %v1166, 1
    %vm1186 = vcmp.lt.s32.totalorder %v1166, 2
    %vm1187 = vcmp.lt.s32.totalorder %v1166, 3
    %vm1188 = vcmp.lt.s32.totalorder %v1166, 4
    %v1189 = vsel %vm1185, %v1169, %v1172
    %v1190 = vsel %vm1188, %v1178, 2102212464
    %v1191 = vsel %vm1187, %v1175, %v1190
    %v1192 = vsel %vm1186, %v1189, %v1191
    %v1193 = vsel %vm1185, %v1172, %v1175
    %v1194 = vsel %vm1188, %v1181, 920167782
    %v1195 = vsel %vm1187, %v1178, %v1194
    %v1196 = vsel %vm1186, %v1193, %v1195
    %v1197 = vsel %vm1185, %v1175, %v1178
    %v1198 = vsel %vm1188, %v1184, 1326507024
    %v1199 = vsel %vm1187, %v1181, %v1198
    %v1200 = vsel %vm1186, %v1197, %v1199
    %v1201 = vshll.u32 %v1161, 8
    %v1202 = vand.u32 %v1201, 65535
    %v1203 = vshrl.u32 %v1201, 16
    %v1204 = vand.u32 %v1200, 65535
    %v1205 = vshrl.u32 %v1200, 16
    %v1206 = vmul.u32 %v1202, %v1204
    %v1207 = vmul.u32 %v1202, %v1205
    %v1208 = vmul.u32 %v1203, %v1204
    %v1209 = vmul.u32 %v1203, %v1205
    %v1210 = vshll.u32 %v1207, 16
    %v1211 = vshrl.u32 %v1207, 16
    %v1212 = vshll.u32 %v1208, 16
    %v1213 = vshrl.u32 %v1208, 16
    %vm1214 = vc.u32 %v1206, %v1210
    %v1215 = vsel %vm1214, 1, 0
    %v1216 = vadd.s32 %v1206, %v1210
    %v1217 = vadd.s32 %v1209, %v1215
    %vm1218 = vc.u32 %v1216, %v1212
    %v1219 = vsel %vm1218, 1, 0
    %v1220 = vadd.s32 %v1216, %v1212
    %v1221 = vadd.s32 %v1217, %v1219
    %v1222 = vadd.s32 %v1221, %v1211
    %v1223 = vadd.s32 %v1222, %v1213
    %v1224 = vand.u32 %v1201, 65535
    %v1225 = vshrl.u32 %v1201, 16
    %v1226 = vand.u32 %v1196, 65535
    %v1227 = vshrl.u32 %v1196, 16
    %v1228 = vmul.u32 %v1224, %v1226
    %v1229 = vmul.u32 %v1224, %v1227
    %v1230 = vmul.u32 %v1225, %v1226
    %v1231 = vmul.u32 %v1225, %v1227
    %v1232 = vshll.u32 %v1229, 16
    %v1233 = vshrl.u32 %v1229, 16
    %v1234 = vshll.u32 %v1230, 16
    %v1235 = vshrl.u32 %v1230, 16
    %vm1236 = vc.u32 %v1228, %v1232
    %v1237 = vsel %vm1236, 1, 0
    %v1238 = vadd.s32 %v1228, %v1232
    %v1239 = vadd.s32 %v1231, %v1237
    %vm1240 = vc.u32 %v1238, %v1234
    %v1241 = vsel %vm1240, 1, 0
    %v1242 = vadd.s32 %v1238, %v1234
    %v1243 = vadd.s32 %v1239, %v1241
    %v1244 = vadd.s32 %v1243, %v1233
    %v1245 = vadd.s32 %v1244, %v1235
    %v1246 = vmul.u32 %v1201, %v1192
    %v1247 = vadd.s32 %v1223, %v1242
    %vm1248 = vc.u32 %v1223, %v1242
    %v1249 = vadd.s32 %v1245, 1
    %v1250 = vsel %vm1248, %v1249, %v1245
    %v1251 = vadd.s32 %v1246, %v1250
    %v1252 = vadd.s32 %v1251, 536870912
    %v1253 = vshrl.u32 %v1252, 30
    %v1254 = vshll.u32 %v1253, 30
    %v1255 = vsub.s32 %v1251, %v1254
    %vm1256 = vcmp.lt.s32.totalorder %v1255, 0
    %v1257 = vsub.s32 0, %v1255
    %v1258 = vsel %vm1256, %v1257, %v1255
    %v1259 = vclz %v1258
    %v1260 = vsub.s32 %v1259, 2
    %vm1261 = vcmp.gt.s32.totalorder 0, %v1260
    %v1262 = vsel %vm1261, 0, %v1260
    %v1263 = vsub.s32 32, %v1262
    %v1264 = vshll.u32 %v1255, %v1262
    %v1265 = vshrl.u32 %v1247, %v1263
    %v1266 = vor.u32 %v1264, %v1265
    %v1267 = vsub.s32 4294967266, %v1262
    %v1268 = vadd.s32 %v1267, 127
    %v1269 = vshll.u32 %v1268, 23
    %v1270 = vor.u32 4788187, %v1269
    %v1271 = vand.u32 2147483647, %v1270
    %v1273 = vcvt.s32.f32 %v1266
    %v1274 = vmul.f32 %v1273, %v1271
    %v1275 = vxor.u32 %v1274, 2147483648
    %v1276 = vsel %vm1155, %v1275, %v1274
    %v1277 = vsub.s32 4, %v1253
    %v1278 = vsel %vm1155, %v1277, %v1253
    %v1279 = vsel %vm1154, %v161, %v1276
    %v1280 = vsel %vm1154, 0, %v1278
    %v1281 = vmul.f32 %v1279, %v1279
    %v1282 = vmul.f32 %v1281, -0.001358992
    %v1283 = vadd.f32 %v1282, 0.041655596
    %v1284 = vmul.f32 %v1281, %v1283
    %v1285 = vadd.f32 %v1284, -0.4999988
    %v1286 = vmul.f32 %v1281, %v1285
    %v1287 = vadd.f32 1.0, %v1286
    %v1288 = vmul.f32 %v1279, %v1279
    %v1289 = vmul.f32 %v1288, -0.00019511016
    %v1290 = vadd.f32 %v1289, 0.008332121
    %v1291 = vmul.f32 %v1288, %v1290
    %v1292 = vadd.f32 %v1291, -0.16666654
    %v1293 = vmul.f32 %v1288, %v1292
    %v1294 = vadd.f32 %v1293, 1.0
    %v1295 = vmul.f32 %v1294, %v1279
    %vm1296 = vweird.f32 %v161
    %v1297 = vadd.s32 %v1280, 3
    %v1298 = vand.u32 %v1297, 3
    %vm1299 = vcmp.lt.s32.totalorder %v1298, 2
    %vm1300 = vcmp.eq.s32.totalorder %v1298, 0
    %v1301 = vxor.u32 %v1295, 2147483648
    %v1302 = vsel %vm1300, %v1287, %v1301
    %vm1303 = vcmp.eq.s32.totalorder %v1298, 2
    %v1304 = vxor.u32 %v1287, 2147483648
    %v1305 = vsel %vm1303, %v1304, %v1295
    %v1306 = vsel %vm1299, %v1302, %v1305
    %v1307 = vsel %vm1296, nan, %v1306
    %v1308 = vand.u32 2147483647, %v162
    %vm1309 = vcmp.le.f32.partialorder %v1308, 0.7853982
    %vm1310 = vcmp.lt.s32.totalorder %v162, 0
    %v1311 = vand.u32 %v162, 2139095040
    %v1312 = vshrl.u32 %v1311, 23
    %v1313 = vsub.s32 %v1312, 127
    %v1314 = vand.u32 2147483647, %v162
    %v1315 = vand.u32 %v1314, 8388607
    %v1316 = vor.u32 %v1315, 8388608
    %v1317 = vsub.s32 0, %v1316
    %v1318 = vadd.s32 %v1313, 1
    %vm1319 = vcmp.gt.s32.totalorder %v1318, 0
    %v1320 = vsel %vm1319, %v1318, 0
    %v1321 = vshrl.u32 %v1320, 5
    %v1322 = vand.u32 %v1320, 31
    %v1323 = vsub.s32 32, %v1322
    %v1324 = vshrl.u32 683565275, %v1323
    %v1325 = vshll.u32 683565275, %v1322
    %v1326 = vshrl.u32 2475754826, %v1323
    %v1327 = vor.u32 %v1325, %v1326
    %v1328 = vshll.u32 2475754826, %v1322
    %v1329 = vshrl.u32 2131351028, %v1323
    %v1330 = vor.u32 %v1328, %v1329
    %v1331 = vshll.u32 2131351028, %v1322
    %v1332 = vshrl.u32 2102212464, %v1323
    %v1333 = vor.u32 %v1331, %v1332
    %v1334 = vshll.u32 2102212464, %v1322
    %v1335 = vshrl.u32 920167782, %v1323
    %v1336 = vor.u32 %v1334, %v1335
    %v1337 = vshll.u32 920167782, %v1322
    %v1338 = vshrl.u32 1326507024, %v1323
    %v1339 = vor.u32 %v1337, %v1338
    %vm1340 = vcmp.lt.s32.totalorder %v1321, 1
    %vm1341 = vcmp.lt.s32.totalorder %v1321, 2
    %vm1342 = vcmp.lt.s32.totalorder %v1321, 3
    %vm1343 = vcmp.lt.s32.totalorder %v1321, 4
    %v1344 = vsel %vm1340, %v1324, %v1327
    %v1345 = vsel %vm1343, %v1333, 2102212464
    %v1346 = vsel %vm1342, %v1330, %v1345
    %v1347 = vsel %vm1341, %v1344, %v1346
    %v1348 = vsel %vm1340, %v1327, %v1330
    %v1349 = vsel %vm1343, %v1336, 920167782
    %v1350 = vsel %vm1342, %v1333, %v1349
    %v1351 = vsel %vm1341, %v1348, %v1350
    %v1352 = vsel %vm1340, %v1330, %v1333
    %v1353 = vsel %vm1343, %v1339, 1326507024
    %v1354 = vsel %vm1342, %v1336, %v1353
    %v1355 = vsel %vm1341, %v1352, %v1354
    %v1356 = vshll.u32 %v1316, 8
    %v1357 = vand.u32 %v1356, 65535
    %v1358 = vshrl.u32 %v1356, 16
    %v1359 = vand.u32 %v1355, 65535
    %v1360 = vshrl.u32 %v1355, 16
    %v1361 = vmul.u32 %v1357, %v1359
    %v1362 = vmul.u32 %v1357, %v1360
    %v1363 = vmul.u32 %v1358, %v1359
    %v1364 = vmul.u32 %v1358, %v1360
    %v1365 = vshll.u32 %v1362, 16
    %v1366 = vshrl.u32 %v1362, 16
    %v1367 = vshll.u32 %v1363, 16
    %v1368 = vshrl.u32 %v1363, 16
    %vm1369 = vc.u32 %v1361, %v1365
    %v1370 = vsel %vm1369, 1, 0
    %v1371 = vadd.s32 %v1361, %v1365
    %v1372 = vadd.s32 %v1364, %v1370
    %vm1373 = vc.u32 %v1371, %v1367
    %v1374 = vsel %vm1373, 1, 0
    %v1375 = vadd.s32 %v1371, %v1367
    %v1376 = vadd.s32 %v1372, %v1374
    %v1377 = vadd.s32 %v1376, %v1366
    %v1378 = vadd.s32 %v1377, %v1368
    %v1379 = vand.u32 %v1356, 65535
    %v1380 = vshrl.u32 %v1356, 16
    %v1381 = vand.u32 %v1351, 65535
    %v1382 = vshrl.u32 %v1351, 16
    %v1383 = vmul.u32 %v1379, %v1381
    %v1384 = vmul.u32 %v1379, %v1382
    %v1385 = vmul.u32 %v1380, %v1381
    %v1386 = vmul.u32 %v1380, %v1382
    %v1387 = vshll.u32 %v1384, 16
    %v1388 = vshrl.u32 %v1384, 16
    %v1389 = vshll.u32 %v1385, 16
    %v1390 = vshrl.u32 %v1385, 16
    %vm1391 = vc.u32 %v1383, %v1387
    %v1392 = vsel %vm1391, 1, 0
    %v1393 = vadd.s32 %v1383, %v1387
    %v1394 = vadd.s32 %v1386, %v1392
    %vm1395 = vc.u32 %v1393, %v1389
    %v1396 = vsel %vm1395, 1, 0
    %v1397 = vadd.s32 %v1393, %v1389
    %v1398 = vadd.s32 %v1394, %v1396
    %v1399 = vadd.s32 %v1398, %v1388
    %v1400 = vadd.s32 %v1399, %v1390
    %v1401 = vmul.u32 %v1356, %v1347
    %v1402 = vadd.s32 %v1378, %v1397
    %vm1403 = vc.u32 %v1378, %v1397
    %v1404 = vadd.s32 %v1400, 1
    %v1405 = vsel %vm1403, %v1404, %v1400
    %v1406 = vadd.s32 %v1401, %v1405
    %v1407 = vadd.s32 %v1406, 536870912
    %v1408 = vshrl.u32 %v1407, 30
    %v1409 = vshll.u32 %v1408, 30
    %v1410 = vsub.s32 %v1406, %v1409
    %vm1411 = vcmp.lt.s32.totalorder %v1410, 0
    %v1412 = vsub.s32 0, %v1410
    %v1413 = vsel %vm1411, %v1412, %v1410
    %v1414 = vclz %v1413
    %v1415 = vsub.s32 %v1414, 2
    %vm1416 = vcmp.gt.s32.totalorder 0, %v1415
    %v1417 = vsel %vm1416, 0, %v1415
    %v1418 = vsub.s32 32, %v1417
    %v1419 = vshll.u32 %v1410, %v1417
    %v1420 = vshrl.u32 %v1402, %v1418
    %v1421 = vor.u32 %v1419, %v1420
    %v1422 = vsub.s32 4294967266, %v1417
    %v1423 = vadd.s32 %v1422, 127
    %v1424 = vshll.u32 %v1423, 23
    %v1425 = vor.u32 4788187, %v1424
    %v1426 = vand.u32 2147483647, %v1425
    %v1428 = vcvt.s32.f32 %v1421
    %v1429 = vmul.f32 %v1428, %v1426
    %v1430 = vxor.u32 %v1429, 2147483648
    %v1431 = vsel %vm1310, %v1430, %v1429
    %v1432 = vsub.s32 4, %v1408
    %v1433 = vsel %vm1310, %v1432, %v1408
    %v1434 = vsel %vm1309, %v162, %v1431
    %v1435 = vsel %vm1309, 0, %v1433
    %v1436 = vmul.f32 %v1434, %v1434
    %v1437 = vmul.f32 %v1436, -0.001358992
    %v1438 = vadd.f32 %v1437, 0.041655596
    %v1439 = vmul.f32 %v1436, %v1438
    %v1440 = vadd.f32 %v1439, -0.4999988
    %v1441 = vmul.f32 %v1436, %v1440
    %v1442 = vadd.f32 1.0, %v1441
    %v1443 = vmul.f32 %v1434, %v1434
    %v1444 = vmul.f32 %v1443, -0.00019511016
    %v1445 = vadd.f32 %v1444, 0.008332121
    %v1446 = vmul.f32 %v1443, %v1445
    %v1447 = vadd.f32 %v1446, -0.16666654
    %v1448 = vmul.f32 %v1443, %v1447
    %v1449 = vadd.f32 %v1448, 1.0
    %v1450 = vmul.f32 %v1449, %v1434
    %vm1451 = vweird.f32 %v162
    %v1452 = vadd.s32 %v1435, 3
    %v1453 = vand.u32 %v1452, 3
    %vm1454 = vcmp.lt.s32.totalorder %v1453, 2
    %vm1455 = vcmp.eq.s32.totalorder %v1453, 0
    %v1456 = vxor.u32 %v1450, 2147483648
    %v1457 = vsel %vm1455, %v1442, %v1456
    %vm1458 = vcmp.eq.s32.totalorder %v1453, 2
    %v1459 = vxor.u32 %v1442, 2147483648
    %v1460 = vsel %vm1458, %v1459, %v1450
    %v1461 = vsel %vm1454, %v1457, %v1460
    %v1462 = vsel %vm1451, nan, %v1461
    %v1463 = vmul.f32 %v186, %v997
    %v1464 = vmul.f32 %v198, %v1152
    %v1465 = vmul.f32 %v210, %v1307
    %v1466 = vmul.f32 %v222, %v1462
    %v1467 = vld [vmem:[#allocation3] sm:$0xff]
    %v1468 = vld [vmem:[#allocation3 + $0x8] sm:$0xff]
    %v1469 = vld [vmem:[#allocation3 + $0x10] sm:$0xff]
    %v1470 = vld [vmem:[#allocation3 + $0x18] sm:$0xff]
    %v1471 = vld [vmem:[#allocation3 + $0x20] sm:$0xff]
    %v1472 = vld [vmem:[#allocation3 + $0x28] sm:$0xff]
    %v1473 = vld [vmem:[#allocation3 + $0x30] sm:$0xff]
    %v1474 = vld [vmem:[#allocation3 + $0x38] sm:$0xff]
    %v1475 = vmul.f32 %v839, 0.1
    %v1476 = vmul.f32 %v840, 0.1
    %v1477 = vmul.f32 %v841, 0.1
    %v1478 = vmul.f32 %v842, 0.1
    %v1479 = vmul.f32 %v1463, 0.1
    %v1480 = vmul.f32 %v1464, 0.1
    %v1481 = vmul.f32 %v1465, 0.1
    %v1482 = vmul.f32 %v1466, 0.1
    %v1483 = vadd.f32 %v1467, %v1475
    %v1484 = vadd.f32 %v1468, %v1476
    %v1485 = vadd.f32 %v1469, %v1477
    %v1486 = vadd.f32 %v1470, %v1478
    %v1487 = vadd.f32 %v1471, %v1479
    %v1488 = vadd.f32 %v1472, %v1480
    %v1489 = vadd.f32 %v1473, %v1481
    %v1490 = vadd.f32 %v1474, %v1482
    %1491 = vst [vmem:[#allocation6] sm:$0xff] %v1483
    %1492 = vst [vmem:[#allocation6 + $0x8] sm:$0xff] %v1484
    %1493 = vst [vmem:[#allocation6 + $0x10] sm:$0xff] %v1485
    %1494 = vst [vmem:[#allocation6 + $0x18] sm:$0xff] %v1486
    %1495 = vst [vmem:[#allocation6 + $0x20] sm:$0xff] %v1487
    %1496 = vst [vmem:[#allocation6 + $0x28] sm:$0xff] %v1488
    %1497 = vst [vmem:[#allocation6 + $0x30] sm:$0xff] %v1489
    %1498 = vst [vmem:[#allocation6 + $0x38] sm:$0xff] %v1490
    // Predicated region
    $region14: #{tpu_custom_call.1} parent=1 // pred_check
      _
    $region15: #{tpu_custom_call.1} parent=1 // pred_check_branch
      %1500 = sbr.rel (0) target = $region17
    $region16: #{tpu_custom_call.1} parent=1 // pred_region
      %1502 = vsyncadd [#allocation5], 0
      %s1503 = sshll.u32 [#allocation6], 4
      %s1504 = int_to_ptr.vmem [resolvable:$true] %s1503
      %s1505 = sshll.u32 %s2, 4
      %s1506 = int_to_ptr.hbm [resolvable:$true] %s1505
      %1511 = dma.vmem_to_hbm [thread:$0]  %s1504, 1024, %s1506, [#allocation5], 512, 512, 32
    $region17: #{tpu_custom_call.1} parent=1 // pred_fallthru
      _
    // Predicated region
    $region18: #{tpu_custom_call.1} parent=1 // pred_check
      _
    $region19: #{tpu_custom_call.1} parent=1 // pred_check_branch
      %1513 = sbr.rel (0) target = $region21
    $region20: #{tpu_custom_call.1} parent=1 // pred_region
      %1515 = dma.done [#allocation5], 1024
    $region21: #{tpu_custom_call.1} parent=1 // pred_fallthru
      _
    %1516 = vsyncpa [#allocation4], 1
    %1517 = vsyncpa [#allocation5], 1

</llo_original>
